<compile_context>
chip_gen: v7x
topology: tpu7x:2x2x1
jax: 0.10.0
libtpu: 0.0.40
codegen_flags: <defaults>
</compile_context>

<pallas_src>
import math
import functools

import jax
import jax.numpy as jnp
from jax.experimental import pallas as pl
from jax.experimental.pallas import tpu as pltpu


def policy_kernel(xT_ref, freq_ref, shift_ref, w_ref, outT_ref, *,
                  compute_dtype=jnp.float32):
    # xT_ref:    (dm_state, TN)   batch on the lane axis
    # freq_ref:  (nb_feat, dm_state)
    # shift_ref: (nb_feat, 1)
    # w_ref:     (dm_act, nb_feat)   (PyTorch nn.Linear weight layout, no transpose needed)
    # outT_ref:  (dm_act, TN)
    zT = jnp.dot(freq_ref[...], xT_ref[...],
                 preferred_element_type=jnp.float32)           # (nb_feat, TN) on the MXU
    # Broadcast-add of shift is ~1 VALU op vs the ~15-25 VALU ops of sin(); kept here
    # (rather than folded into an augmented matmul) for lowering robustness.
    zT = zT + shift_ref[...]
    featT = jnp.sin(zT.astype(compute_dtype))                  # VPU; bf16 optional on v6e/v7x
    outT_ref[...] = jnp.dot(w_ref[...], featT,
                            preferred_element_type=jnp.float32).astype(outT_ref.dtype)


def _pick_tile_n(N, tile_n):
    """Lane-tile size: whole batch if small, else a multiple of 512 with >= 2 grid steps."""
    if N <= 1024:
        return N                       # single block; per-step overhead irrelevant here
    tn = min(tile_n, N // 2)           # >= 2 grid steps -> both v7x TensorCores get work
    tn = max(512, (tn // 512) * 512)   # multiple of 512 (whole MXU passes on all gens)
    return tn


@functools.partial(jax.jit, static_argnames=("tile_n", "use_bf16_features"))
def policy_forward_t(xT, freq, shift, w_mu, tile_n=16384, use_bf16_features=False):
    """Transpose-free deterministic Policy.forward.

    xT:    (dm_state, N)   float32  (batch on the trailing/lane axis)
    freq:  (nb_feat, dm_state)
    shift: (nb_feat, 1)
    w_mu:  (dm_act, nb_feat)   (same layout as nn.Linear.weight)
    returns (dm_act, N)
    """
    dm_state, N = xT.shape
    nb_feat = freq.shape[0]
    dm_act = w_mu.shape[0]

    tn = _pick_tile_n(N, tile_n)
    grid = (pl.cdiv(N, tn),)           # partial last block is masked by Pallas; no pad/slice

    kernel = functools.partial(
        policy_kernel,
        compute_dtype=jnp.bfloat16 if use_bf16_features else jnp.float32)

    outT = pl.pallas_call(
        kernel,
        out_shape=jax.ShapeDtypeStruct((dm_act, N), jnp.float32),
        grid_spec=pltpu.PrefetchScalarGridSpec(
            num_scalar_prefetch=0,
            grid=grid,
            in_specs=[
                pl.BlockSpec((dm_state, tn), lambda i: (0, i)),
                pl.BlockSpec((nb_feat, dm_state), lambda i: (0, 0)),
                pl.BlockSpec((nb_feat, 1), lambda i: (0, 0)),
                pl.BlockSpec((dm_act, nb_feat), lambda i: (0, 0)),
            ],
            out_specs=pl.BlockSpec((dm_act, tn), lambda i: (0, i)),
        ),
        compiler_params=pltpu.CompilerParams(
            dimension_semantics=("parallel",)),
    )(xT, freq, shift, w_mu)
    return outT


@functools.partial(jax.jit, static_argnames=("tile_n", "use_bf16_features"))
def policy_forward(x, freq, shift, w_mu, tile_n=16384, use_bf16_features=False):
    """API-compatible deterministic Policy.forward: x (N, dm_state) -> (N, dm_act).

    Prefer policy_forward_t when the caller can keep the batch in (dm_state, N) /
    (dm_act, N) layout — the two transposes here are extra HBM passes.
    """
    return policy_forward_t(x.T, freq, shift, w_mu, tile_n=tile_n,
                            use_bf16_features=use_bf16_features).T


if __name__ == "__main__":
    # ---- deterministic "module __init__" parameter construction ----
    dm_state = 4
    dm_act = 2
    nb_feat = 32
    band = 1.0
    mult = 0.5
    cov = 0.1

    key = jax.random.PRNGKey(0)
    k_freq, k_shift, k_w, k_x, k_x2 = jax.random.split(key, 5)

    # FourierFeatures: freq ~ N(0, diag(1/(mult*band)))  -> std = 1/sqrt(mult*band) per dim
    freq_std = 1.0 / math.sqrt(mult * band)
    freq = jax.random.normal(k_freq, (nb_feat, dm_state), jnp.float32) * freq_std
    shift = jax.random.uniform(k_shift, (nb_feat, 1), jnp.float32,
                               minval=-math.pi, maxval=math.pi)

    # nn.Linear(nb_feat, dm_act, bias=False) weight: [dm_act, nb_feat] (kept as-is)
    bound = 1.0 / math.sqrt(nb_feat)
    w_mu = jax.random.uniform(k_w, (dm_act, nb_feat), jnp.float32,
                              minval=-bound, maxval=bound)

    # TODO(synk): stoch=True path (torch.normal with exp(log_std), a [dm_act, dm_act]
    # std matrix) is host-side sampling glue, not a hot-path kernel; only the
    # deterministic forward is kernelized.

    def reference(xs):
        return jnp.sin(xs @ freq.T + shift.T) @ w_mu.T

    # ---- small single-block case (N=16 -> grid=(1,), whole batch in one tile) ----
    N = 16
    x = jax.random.normal(k_x, (N, dm_state), jnp.float32)
    out = jax.block_until_ready(policy_forward(x, freq, shift, w_mu))
    assert out.shape == (N, dm_act)
    assert jnp.allclose(out, reference(x), atol=1e-5, rtol=1e-5), "mismatch (N=16)"

    # ---- ragged multi-step case via the transpose-free entry:
    #      N=1300 -> tn=512, grid=(3,), last block partial (masked, no pad/slice) ----
    N2 = 1300
    x2 = jax.random.normal(k_x2, (N2, dm_state), jnp.float32)
    out2T = jax.block_until_ready(policy_forward_t(x2.T, freq, shift, w_mu))
    assert out2T.shape == (dm_act, N2)
    assert jnp.allclose(out2T.T, reference(x2), atol=1e-5, rtol=1e-5), "mismatch (N=1300)"

    print("KERNEL_OK")
</pallas_src>

<mosaic_0001>
module attributes {stable_mosaic.version = 11 : i64} {
  func.func @policy_kernel(%arg0: i32, %arg1: memref<4x16xf32, #tpu.memory_space<vmem>>, %arg2: memref<32x4xf32, #tpu.memory_space<vmem>>, %arg3: memref<32x1xf32, #tpu.memory_space<vmem>>, %arg4: memref<2x32xf32, #tpu.memory_space<vmem>>, %arg5: memref<2x16xf32, #tpu.memory_space<vmem>>) attributes {dimension_semantics = [#tpu.dimension_semantics<parallel>], iteration_bounds = array<i64: 1>, scalar_prefetch = 0 : i64, scratch_operands = 0 : i64, tpu.core_type = #tpu.core_type<tc>, window_params = [{transform_indices = @transform_0, window_bounds = array<i64: 4, 16>}, {pipeline_mode = #tpu.pipeline_mode<synchronous>, transform_indices = @transform_1, window_bounds = array<i64: 32, 4>}, {pipeline_mode = #tpu.pipeline_mode<synchronous>, transform_indices = @transform_2, window_bounds = array<i64: 32, 1>}, {pipeline_mode = #tpu.pipeline_mode<synchronous>, transform_indices = @transform_3, window_bounds = array<i64: 2, 32>}, {transform_indices = @transform_4, window_bounds = array<i64: 2, 16>}]} {
    %c0 = arith.constant 0 : index
    %c0_0 = arith.constant 0 : index
    %0 = vector.load %arg2[%c0, %c0_0] : memref<32x4xf32, #tpu.memory_space<vmem>>, vector<32x4xf32>
    %c0_1 = arith.constant 0 : index
    %c0_2 = arith.constant 0 : index
    %1 = vector.load %arg1[%c0_1, %c0_2] : memref<4x16xf32, #tpu.memory_space<vmem>>, vector<4x16xf32>
    %cst = arith.constant dense<0.000000e+00> : vector<32x16xf32>
    %2 = tpu.matmul %0, %1, %cst {dimension_numbers = #tpu.dot_dimension_numbers<[1], [0], [0], [1], [0, 0, 1, 1], [], []>} : vector<32x4xf32>, vector<4x16xf32>, vector<32x16xf32> -> vector<32x16xf32>
    %c0_3 = arith.constant 0 : index
    %c0_4 = arith.constant 0 : index
    %3 = vector.load %arg3[%c0_3, %c0_4] : memref<32x1xf32, #tpu.memory_space<vmem>>, vector<32x1xf32>
    %4 = vector.broadcast %3 : vector<32x1xf32> to vector<32x16xf32>
    %5 = arith.addf %2, %4 : vector<32x16xf32>
    %6 = math.sin %5 : vector<32x16xf32>
    %c0_5 = arith.constant 0 : index
    %c0_6 = arith.constant 0 : index
    %7 = vector.load %arg4[%c0_5, %c0_6] : memref<2x32xf32, #tpu.memory_space<vmem>>, vector<2x32xf32>
    %cst_7 = arith.constant dense<0.000000e+00> : vector<2x16xf32>
    %8 = tpu.matmul %7, %6, %cst_7 {dimension_numbers = #tpu.dot_dimension_numbers<[1], [0], [0], [1], [0, 0, 1, 1], [], []>} : vector<2x32xf32>, vector<32x16xf32>, vector<2x16xf32> -> vector<2x16xf32>
    %c0_8 = arith.constant 0 : index
    %c0_9 = arith.constant 0 : index
    %9 = vector.load %arg5[%c0_8, %c0_9] : memref<2x16xf32, #tpu.memory_space<vmem>>, vector<2x16xf32>
    tpu.vector_store %arg5[%c0_8, %c0_9], %8 {strides = array<i32>} : memref<2x16xf32, #tpu.memory_space<vmem>>, vector<2x16xf32>,
    return
  }
  func.func @transform_0(%arg0: i32) -> (i32, i32) {
    %c0_i32 = arith.constant 0 : i32
    %c0_i32_0 = arith.constant 0 : i32
    return %c0_i32, %arg0 : i32, i32
  }
  func.func @transform_1(%arg0: i32) -> (i32, i32) {
    %c0_i32 = arith.constant 0 : i32
    %c0_i32_0 = arith.constant 0 : i32
    %c0_i32_1 = arith.constant 0 : i32
    return %c0_i32, %c0_i32_0 : i32, i32
  }
  func.func @transform_2(%arg0: i32) -> (i32, i32) {
    %c0_i32 = arith.constant 0 : i32
    %c0_i32_0 = arith.constant 0 : i32
    %c0_i32_1 = arith.constant 0 : i32
    return %c0_i32, %c0_i32_0 : i32, i32
  }
  func.func @transform_3(%arg0: i32) -> (i32, i32) {
    %c0_i32 = arith.constant 0 : i32
    %c0_i32_0 = arith.constant 0 : i32
    %c0_i32_1 = arith.constant 0 : i32
    return %c0_i32, %c0_i32_0 : i32, i32
  }
  func.func @transform_4(%arg0: i32) -> (i32, i32) {
    %c0_i32 = arith.constant 0 : i32
    %c0_i32_0 = arith.constant 0 : i32
    return %c0_i32, %arg0 : i32, i32
  }
}

</mosaic_0001>

<llo_original>
// kernel: policy_forward_t.1
$region0: #{policy_forward_t.1}
  #allocation0 [shape = 'u32[]', space=smem, size = 0x4, offset = 0x4, fixed_abs, tag = 'smem constant byte address 0x4 - core index']
  #allocation1 [shape = 'u32[144,128]{1,0:T(1,128)}', space=vmem, size = 0x12000, scoped, tag = 'internal scratch']
  %s0 = inlined_call_operand.vmem [shape: f32[4,16], index: 0, kind: input, shape index: {}]
  %s1 = inlined_call_operand.vmem [shape: f32[32,4], index: 1, kind: input, shape index: {}]
  %s2 = inlined_call_operand.vmem [shape: f32[32,1], index: 2, kind: input, shape index: {}]
  %s3 = inlined_call_operand.vmem [shape: f32[2,32], index: 3, kind: input, shape index: {}]
  %s4 = inlined_call_operand.hbm [shape: f32[2,16], index: 4, kind: output, shape index: {}]
  %s5 = sld [smem:[#allocation0]]
  $region26: #{policy_forward_t.1} parent=0
    _
  %s7 = ssub.s32 1, %s5
  %s8 = scalar_select 0, %s7, %s5
  $region1: #{policy_forward_t.1} parent=0
    #allocation2 [shape = 'u8[1024]{0}', space=vmem, size = 0x400, scoped, tag = 'output window, operand 0, single buffered']
    #allocation3 [shape = 's32[1]{0}', space=sflag, size = 0x4, scoped, tag = 'scoped memory for policy_forward_t.1']
    %9 = vsyncpa [#allocation3], 0
    // Predicated region
    $region2: #{policy_forward_t.1} parent=1 // pred_check
      _
    $region3: #{policy_forward_t.1} parent=1 // pred_check_branch
      %11 = sbr.rel (0) target = $region5
    $region4: #{policy_forward_t.1} parent=1 // pred_region
      _
    $region5: #{policy_forward_t.1} parent=1 // pred_fallthru
      _
    // Predicated region
    $region6: #{policy_forward_t.1} parent=1 // pred_check
      _
    $region7: #{policy_forward_t.1} parent=1 // pred_check_branch
      %13 = sbr.rel (0) target = $region9
    $region8: #{policy_forward_t.1} parent=1 // pred_region
      _
    $region9: #{policy_forward_t.1} parent=1 // pred_fallthru
      _
    // Predicated region
    $region10: #{policy_forward_t.1} parent=1 // pred_check
      _
    $region11: #{policy_forward_t.1} parent=1 // pred_check_branch
      %15 = sbr.rel (0) target = $region13
    $region12: #{policy_forward_t.1} parent=1 // pred_region
      _
    $region13: #{policy_forward_t.1} parent=1 // pred_fallthru
      _
    // Predicated region
    $region14: #{policy_forward_t.1} parent=1 // pred_check
      _
    $region15: #{policy_forward_t.1} parent=1 // pred_check_branch
      %17 = sbr.rel (0) target = $region17
    $region16: #{policy_forward_t.1} parent=1 // pred_region
      _
    $region17: #{policy_forward_t.1} parent=1 // pred_fallthru
      _
    %v18 = vld [vmem:[%s1] sm:$0xff]
    %v19 = vld [vmem:[%s1 + $0x8] sm:$0xff]
    %v20 = vld [vmem:[%s1 + $0x10] sm:$0xff]
    %v21 = vld [vmem:[%s1 + $0x18] sm:$0xff]
    %v22 = vld [vmem:[%s0] sm:$0xf]
    %v23 = vld [vmem:[%s2] sm:$0xff]
    %v24 = vld [vmem:[%s2 + $0x8] sm:$0xff]
    %v25 = vld [vmem:[%s2 + $0x10] sm:$0xff]
    %v26 = vld [vmem:[%s2 + $0x18] sm:$0xff]
    %28 = vset.pattern.permute.xlu0 0
    %29 = vperm.xlu0 %28, %v23
    %v30 = vpop.permute.xlu0 %29
    %33 = vset.pattern.permute.xlu0 0
    %34 = vperm.xlu0 %33, %v24
    %v35 = vpop.permute.xlu0 %34
    %38 = vset.pattern.permute.xlu0 0
    %39 = vperm.xlu0 %38, %v25
    %v40 = vpop.permute.xlu0 %39
    %43 = vset.pattern.permute.xlu0 0
    %44 = vperm.xlu0 %43, %v26
    %v45 = vpop.permute.xlu0 %44
    %vm47 = vcmask 31744
    %v49 = vsel %vm47, %v18, 0
    %v52 = vsel %vm47, %v19, 0
    %v55 = vsel %vm47, %v20, 0
    %v58 = vsel %vm47, %v21, 0
    %vm60 = vcmask 1043456
    %v62 = vsel %vm60, %v22, 0
    %64 = vmatprep.subr.mxu0 0.0
    %65 = vmatpush1.msra.mxu0 %v62
    %66 = vmatprep.subr.mxu0 0.0
    %67 = vmatpush1.msra.mxu0 0.0
    %68 = vmatprep.subr.mxu0 0.0
    %69 = vmatpush1.msra.mxu0 0.0
    %70 = vmatprep.subr.mxu0 0.0
    %71 = vmatpush1.msra.mxu0 0.0
    %72 = vmatprep.subr.mxu0 0.0
    %73 = vmatpush1.msra.mxu0 0.0
    %74 = vmatprep.subr.mxu0 0.0
    %75 = vmatpush1.msra.mxu0 0.0
    %76 = vmatprep.subr.mxu0 0.0
    %77 = vmatpush1.msra.mxu0 0.0
    %78 = vmatprep.subr.mxu0 0.0
    %79 = vmatpush1.msra.mxu0 0.0
    %80 = vmatprep.subr.mxu0 0.0
    %81 = vmatpush1.msra.mxu0 0.0
    %82 = vmatprep.subr.mxu0 0.0
    %83 = vmatpush1.msra.mxu0 0.0
    %84 = vmatprep.subr.mxu0 0.0
    %85 = vmatpush1.msra.mxu0 0.0
    %86 = vmatprep.subr.mxu0 0.0
    %87 = vmatpush1.msra.mxu0 0.0
    %88 = vmatprep.subr.mxu0 0.0
    %89 = vmatpush1.msra.mxu0 0.0
    %90 = vmatprep.subr.mxu0 0.0
    %91 = vmatpush1.msra.mxu0 0.0
    %92 = vmatprep.subr.mxu0 0.0
    %93 = vmatpush1.msra.mxu0 0.0
    %94 = vmatprep.subr.mxu0 0.0
    %95 = vmatpush1.msra.mxu0 0.0
    %96 = vmatprep.subr.mxu0 0.0
    %97 = vmatpush1.msra.mxu0 0.0
    %98 = vmatprep.subr.mxu0 0.0
    %99 = vmatpush1.msra.mxu0 0.0
    %100 = vmatprep.subr.mxu0 0.0
    %101 = vmatpush1.msra.mxu0 0.0
    %102 = vmatprep.subr.mxu0 0.0
    %103 = vmatpush1.msra.mxu0 0.0
    %104 = vmatprep.subr.mxu0 0.0
    %105 = vmatpush1.msra.mxu0 0.0
    %106 = vmatprep.subr.mxu0 0.0
    %107 = vmatpush1.msra.mxu0 0.0
    %108 = vmatprep.subr.mxu0 0.0
    %109 = vmatpush1.msra.mxu0 0.0
    %110 = vmatprep.subr.mxu0 0.0
    %111 = vmatpush1.msra.mxu0 0.0
    %112 = vmatprep.subr.mxu0 0.0
    %113 = vmatpush1.msra.mxu0 0.0
    %114 = vmatprep.subr.mxu0 0.0
    %115 = vmatpush1.msra.mxu0 0.0
    %116 = vmatprep.subr.mxu0 0.0
    %117 = vmatpush1.msra.mxu0 0.0
    %118 = vmatprep.subr.mxu0 0.0
    %119 = vmatpush1.msra.mxu0 0.0
    %120 = vmatprep.subr.mxu0 0.0
    %121 = vmatpush1.msra.mxu0 0.0
    %122 = vmatprep.subr.mxu0 0.0
    %123 = vmatpush1.msra.mxu0 0.0
    %124 = vmatprep.subr.mxu0 0.0
    %125 = vmatpush1.msra.mxu0 0.0
    %126 = vmatprep.subr.mxu0 0.0
    %127 = vmatpush1.msra.mxu0 0.0
    %128 = vmatprep.mubr.f32.mxu0 0.0
    %129 = vmatmul.mubr.f32.gmra.mrb[0].mxu0 %v49
    %v130 = vpop.f32.mrb[0].mxu0
    %v131 = vadd.f32 %v30, %v130
    %v132 = vpop.f32.mrb[0].mxu0
    %133 = vmatprep.mubr.f32.mxu0 0.0
    %134 = vmatmul.mubr.f32.gmra.mrb[0].mxu0 %v52
    %v135 = vpop.f32.mrb[0].mxu0
    %v136 = vadd.f32 %v35, %v135
    %v137 = vpop.f32.mrb[0].mxu0
    %138 = vmatprep.mubr.f32.mxu0 0.0
    %139 = vmatmul.mubr.f32.gmra.mrb[0].mxu0 %v55
    %v140 = vpop.f32.mrb[0].mxu0
    %v141 = vadd.f32 %v40, %v140
    %v142 = vpop.f32.mrb[0].mxu0
    %143 = vmatprep.mubr.f32.mxu0 0.0
    %144 = vmatmul.mubr.f32.gmra.mrb[0].mxu0 %v58
    %v145 = vpop.f32.mrb[0].mxu0
    %v146 = vadd.f32 %v45, %v145
    %v147 = vpop.f32.mrb[0].mxu0
    %148 = vdwg.mxu0
    %v149 = vand.u32 2147483647, %v131
    %vm150 = vcmp.le.f32.partialorder %v149, 0.7853982
    %vm151 = vcmp.lt.s32.totalorder %v131, 0
    %v152 = vand.u32 %v131, 2139095040
    %v153 = vshrl.u32 %v152, 23
    %v154 = vsub.s32 %v153, 127
    %v155 = vand.u32 2147483647, %v131
    %v156 = vand.u32 %v155, 8388607
    %v157 = vor.u32 %v156, 8388608
    %v158 = vsub.s32 0, %v157
    %v159 = vadd.s32 %v154, 1
    %vm160 = vcmp.gt.s32.totalorder %v159, 0
    %v161 = vsel %vm160, %v159, 0
    %v162 = vshrl.u32 %v161, 5
    %v163 = vand.u32 %v161, 31
    %v164 = vsub.s32 32, %v163
    %v165 = vshrl.u32 683565275, %v164
    %v166 = vshll.u32 683565275, %v163
    %v167 = vshrl.u32 2475754826, %v164
    %v168 = vor.u32 %v166, %v167
    %v169 = vshll.u32 2475754826, %v163
    %v170 = vshrl.u32 2131351028, %v164
    %v171 = vor.u32 %v169, %v170
    %v172 = vshll.u32 2131351028, %v163
    %v173 = vshrl.u32 2102212464, %v164
    %v174 = vor.u32 %v172, %v173
    %v175 = vshll.u32 2102212464, %v163
    %v176 = vshrl.u32 920167782, %v164
    %v177 = vor.u32 %v175, %v176
    %v178 = vshll.u32 920167782, %v163
    %v179 = vshrl.u32 1326507024, %v164
    %v180 = vor.u32 %v178, %v179
    %vm181 = vcmp.lt.s32.totalorder %v162, 1
    %vm182 = vcmp.lt.s32.totalorder %v162, 2
    %vm183 = vcmp.lt.s32.totalorder %v162, 3
    %vm184 = vcmp.lt.s32.totalorder %v162, 4
    %v185 = vsel %vm181, %v165, %v168
    %v186 = vsel %vm184, %v174, 2102212464
    %v187 = vsel %vm183, %v171, %v186
    %v188 = vsel %vm182, %v185, %v187
    %v189 = vsel %vm181, %v168, %v171
    %v190 = vsel %vm184, %v177, 920167782
    %v191 = vsel %vm183, %v174, %v190
    %v192 = vsel %vm182, %v189, %v191
    %v193 = vsel %vm181, %v171, %v174
    %v194 = vsel %vm184, %v180, 1326507024
    %v195 = vsel %vm183, %v177, %v194
    %v196 = vsel %vm182, %v193, %v195
    %v197 = vshll.u32 %v157, 8
    %v198 = vmul.u32.u64.compose %v197, %v196
    %v199 = vextract.low.u32 %v198
    %v200 = vextract.high.u32 %v198
    %v201 = vmul.u32.u64.compose %v197, %v192
    %v202 = vextract.low.u32 %v201
    %v203 = vextract.high.u32 %v201
    %v204 = vmul.u32 %v197, %v188
    %v205 = vadd.s32 %v200, %v202
    %vm206 = vc.u32 %v200, %v202
    %v207 = vadd.s32 %v203, 1
    %v208 = vsel %vm206, %v207, %v203
    %v209 = vadd.s32 %v204, %v208
    %v210 = vadd.s32 %v209, 536870912
    %v211 = vshrl.u32 %v210, 30
    %v212 = vshll.u32 %v211, 30
    %v213 = vsub.s32 %v209, %v212
    %vm214 = vcmp.lt.s32.totalorder %v213, 0
    %v215 = vsub.s32 0, %v213
    %v216 = vsel %vm214, %v215, %v213
    %v217 = vclz %v216
    %v218 = vsub.s32 %v217, 2
    %vm219 = vcmp.gt.s32.totalorder 0, %v218
    %v220 = vsel %vm219, 0, %v218
    %v221 = vsub.s32 32, %v220
    %v222 = vshll.u32 %v213, %v220
    %v223 = vshrl.u32 %v205, %v221
    %v224 = vor.u32 %v222, %v223
    %v225 = vsub.s32 4294967266, %v220
    %v226 = vadd.s32 %v225, 127
    %v227 = vshll.u32 %v226, 23
    %v228 = vor.u32 4788187, %v227
    %v229 = vand.u32 2147483647, %v228
    %v231 = vcvt.s32.f32 %v224
    %v232 = vmul.f32 %v231, %v229
    %v233 = vxor.u32 %v232, 2147483648
    %v234 = vsel %vm151, %v233, %v232
    %v235 = vsub.s32 4, %v211
    %v236 = vsel %vm151, %v235, %v211
    %v237 = vsel %vm150, %v131, %v234
    %v238 = vsel %vm150, 0, %v236
    %v239 = vcosq.f32.pop %v237
    %v240 = vsinq.f32.pop %v237
    %vm241 = vweird.f32 %v131
    %v242 = vadd.s32 %v238, 3
    %v243 = vand.u32 %v242, 3
    %vm244 = vcmp.lt.s32.totalorder %v243, 2
    %vm245 = vcmp.eq.s32.totalorder %v243, 0
    %v246 = vxor.u32 %v240, 2147483648
    %v247 = vsel %vm245, %v239, %v246
    %vm248 = vcmp.eq.s32.totalorder %v243, 2
    %v249 = vxor.u32 %v239, 2147483648
    %v250 = vsel %vm248, %v249, %v240
    %v251 = vsel %vm244, %v247, %v250
    %v252 = vsel %vm241, nan, %v251
    %v253 = vand.u32 2147483647, %v136
    %vm254 = vcmp.le.f32.partialorder %v253, 0.7853982
    %vm255 = vcmp.lt.s32.totalorder %v136, 0
    %v256 = vand.u32 %v136, 2139095040
    %v257 = vshrl.u32 %v256, 23
    %v258 = vsub.s32 %v257, 127
    %v259 = vand.u32 2147483647, %v136
    %v260 = vand.u32 %v259, 8388607
    %v261 = vor.u32 %v260, 8388608
    %v262 = vsub.s32 0, %v261
    %v263 = vadd.s32 %v258, 1
    %vm264 = vcmp.gt.s32.totalorder %v263, 0
    %v265 = vsel %vm264, %v263, 0
    %v266 = vshrl.u32 %v265, 5
    %v267 = vand.u32 %v265, 31
    %v268 = vsub.s32 32, %v267
    %v269 = vshrl.u32 683565275, %v268
    %v270 = vshll.u32 683565275, %v267
    %v271 = vshrl.u32 2475754826, %v268
    %v272 = vor.u32 %v270, %v271
    %v273 = vshll.u32 2475754826, %v267
    %v274 = vshrl.u32 2131351028, %v268
    %v275 = vor.u32 %v273, %v274
    %v276 = vshll.u32 2131351028, %v267
    %v277 = vshrl.u32 2102212464, %v268
    %v278 = vor.u32 %v276, %v277
    %v279 = vshll.u32 2102212464, %v267
    %v280 = vshrl.u32 920167782, %v268
    %v281 = vor.u32 %v279, %v280
    %v282 = vshll.u32 920167782, %v267
    %v283 = vshrl.u32 1326507024, %v268
    %v284 = vor.u32 %v282, %v283
    %vm285 = vcmp.lt.s32.totalorder %v266, 1
    %vm286 = vcmp.lt.s32.totalorder %v266, 2
    %vm287 = vcmp.lt.s32.totalorder %v266, 3
    %vm288 = vcmp.lt.s32.totalorder %v266, 4
    %v289 = vsel %vm285, %v269, %v272
    %v290 = vsel %vm288, %v278, 2102212464
    %v291 = vsel %vm287, %v275, %v290
    %v292 = vsel %vm286, %v289, %v291
    %v293 = vsel %vm285, %v272, %v275
    %v294 = vsel %vm288, %v281, 920167782
    %v295 = vsel %vm287, %v278, %v294
    %v296 = vsel %vm286, %v293, %v295
    %v297 = vsel %vm285, %v275, %v278
    %v298 = vsel %vm288, %v284, 1326507024
    %v299 = vsel %vm287, %v281, %v298
    %v300 = vsel %vm286, %v297, %v299
    %v301 = vshll.u32 %v261, 8
    %v302 = vmul.u32.u64.compose %v301, %v300
    %v303 = vextract.low.u32 %v302
    %v304 = vextract.high.u32 %v302
    %v305 = vmul.u32.u64.compose %v301, %v296
    %v306 = vextract.low.u32 %v305
    %v307 = vextract.high.u32 %v305
    %v308 = vmul.u32 %v301, %v292
    %v309 = vadd.s32 %v304, %v306
    %vm310 = vc.u32 %v304, %v306
    %v311 = vadd.s32 %v307, 1
    %v312 = vsel %vm310, %v311, %v307
    %v313 = vadd.s32 %v308, %v312
    %v314 = vadd.s32 %v313, 536870912
    %v315 = vshrl.u32 %v314, 30
    %v316 = vshll.u32 %v315, 30
    %v317 = vsub.s32 %v313, %v316
    %vm318 = vcmp.lt.s32.totalorder %v317, 0
    %v319 = vsub.s32 0, %v317
    %v320 = vsel %vm318, %v319, %v317
    %v321 = vclz %v320
    %v322 = vsub.s32 %v321, 2
    %vm323 = vcmp.gt.s32.totalorder 0, %v322
    %v324 = vsel %vm323, 0, %v322
    %v325 = vsub.s32 32, %v324
    %v326 = vshll.u32 %v317, %v324
    %v327 = vshrl.u32 %v309, %v325
    %v328 = vor.u32 %v326, %v327
    %v329 = vsub.s32 4294967266, %v324
    %v330 = vadd.s32 %v329, 127
    %v331 = vshll.u32 %v330, 23
    %v332 = vor.u32 4788187, %v331
    %v333 = vand.u32 2147483647, %v332
    %v335 = vcvt.s32.f32 %v328
    %v336 = vmul.f32 %v335, %v333
    %v337 = vxor.u32 %v336, 2147483648
    %v338 = vsel %vm255, %v337, %v336
    %v339 = vsub.s32 4, %v315
    %v340 = vsel %vm255, %v339, %v315
    %v341 = vsel %vm254, %v136, %v338
    %v342 = vsel %vm254, 0, %v340
    %v343 = vcosq.f32.pop %v341
    %v344 = vsinq.f32.pop %v341
    %vm345 = vweird.f32 %v136
    %v346 = vadd.s32 %v342, 3
    %v347 = vand.u32 %v346, 3
    %vm348 = vcmp.lt.s32.totalorder %v347, 2
    %vm349 = vcmp.eq.s32.totalorder %v347, 0
    %v350 = vxor.u32 %v344, 2147483648
    %v351 = vsel %vm349, %v343, %v350
    %vm352 = vcmp.eq.s32.totalorder %v347, 2
    %v353 = vxor.u32 %v343, 2147483648
    %v354 = vsel %vm352, %v353, %v344
    %v355 = vsel %vm348, %v351, %v354
    %v356 = vsel %vm345, nan, %v355
    %v357 = vand.u32 2147483647, %v141
    %vm358 = vcmp.le.f32.partialorder %v357, 0.7853982
    %vm359 = vcmp.lt.s32.totalorder %v141, 0
    %v360 = vand.u32 %v141, 2139095040
    %v361 = vshrl.u32 %v360, 23
    %v362 = vsub.s32 %v361, 127
    %v363 = vand.u32 2147483647, %v141
    %v364 = vand.u32 %v363, 8388607
    %v365 = vor.u32 %v364, 8388608
    %v366 = vsub.s32 0, %v365
    %v367 = vadd.s32 %v362, 1
    %vm368 = vcmp.gt.s32.totalorder %v367, 0
    %v369 = vsel %vm368, %v367, 0
    %v370 = vshrl.u32 %v369, 5
    %v371 = vand.u32 %v369, 31
    %v372 = vsub.s32 32, %v371
    %v373 = vshrl.u32 683565275, %v372
    %v374 = vshll.u32 683565275, %v371
    %v375 = vshrl.u32 2475754826, %v372
    %v376 = vor.u32 %v374, %v375
    %v377 = vshll.u32 2475754826, %v371
    %v378 = vshrl.u32 2131351028, %v372
    %v379 = vor.u32 %v377, %v378
    %v380 = vshll.u32 2131351028, %v371
    %v381 = vshrl.u32 2102212464, %v372
    %v382 = vor.u32 %v380, %v381
    %v383 = vshll.u32 2102212464, %v371
    %v384 = vshrl.u32 920167782, %v372
    %v385 = vor.u32 %v383, %v384
    %v386 = vshll.u32 920167782, %v371
    %v387 = vshrl.u32 1326507024, %v372
    %v388 = vor.u32 %v386, %v387
    %vm389 = vcmp.lt.s32.totalorder %v370, 1
    %vm390 = vcmp.lt.s32.totalorder %v370, 2
    %vm391 = vcmp.lt.s32.totalorder %v370, 3
    %vm392 = vcmp.lt.s32.totalorder %v370, 4
    %v393 = vsel %vm389, %v373, %v376
    %v394 = vsel %vm392, %v382, 2102212464
    %v395 = vsel %vm391, %v379, %v394
    %v396 = vsel %vm390, %v393, %v395
    %v397 = vsel %vm389, %v376, %v379
    %v398 = vsel %vm392, %v385, 920167782
    %v399 = vsel %vm391, %v382, %v398
    %v400 = vsel %vm390, %v397, %v399
    %v401 = vsel %vm389, %v379, %v382
    %v402 = vsel %vm392, %v388, 1326507024
    %v403 = vsel %vm391, %v385, %v402
    %v404 = vsel %vm390, %v401, %v403
    %v405 = vshll.u32 %v365, 8
    %v406 = vmul.u32.u64.compose %v405, %v404
    %v407 = vextract.low.u32 %v406
    %v408 = vextract.high.u32 %v406
    %v409 = vmul.u32.u64.compose %v405, %v400
    %v410 = vextract.low.u32 %v409
    %v411 = vextract.high.u32 %v409
    %v412 = vmul.u32 %v405, %v396
    %v413 = vadd.s32 %v408, %v410
    %vm414 = vc.u32 %v408, %v410
    %v415 = vadd.s32 %v411, 1
    %v416 = vsel %vm414, %v415, %v411
    %v417 = vadd.s32 %v412, %v416
    %v418 = vadd.s32 %v417, 536870912
    %v419 = vshrl.u32 %v418, 30
    %v420 = vshll.u32 %v419, 30
    %v421 = vsub.s32 %v417, %v420
    %vm422 = vcmp.lt.s32.totalorder %v421, 0
    %v423 = vsub.s32 0, %v421
    %v424 = vsel %vm422, %v423, %v421
    %v425 = vclz %v424
    %v426 = vsub.s32 %v425, 2
    %vm427 = vcmp.gt.s32.totalorder 0, %v426
    %v428 = vsel %vm427, 0, %v426
    %v429 = vsub.s32 32, %v428
    %v430 = vshll.u32 %v421, %v428
    %v431 = vshrl.u32 %v413, %v429
    %v432 = vor.u32 %v430, %v431
    %v433 = vsub.s32 4294967266, %v428
    %v434 = vadd.s32 %v433, 127
    %v435 = vshll.u32 %v434, 23
    %v436 = vor.u32 4788187, %v435
    %v437 = vand.u32 2147483647, %v436
    %v439 = vcvt.s32.f32 %v432
    %v440 = vmul.f32 %v439, %v437
    %v441 = vxor.u32 %v440, 2147483648
    %v442 = vsel %vm359, %v441, %v440
    %v443 = vsub.s32 4, %v419
    %v444 = vsel %vm359, %v443, %v419
    %v445 = vsel %vm358, %v141, %v442
    %v446 = vsel %vm358, 0, %v444
    %v447 = vcosq.f32.pop %v445
    %v448 = vsinq.f32.pop %v445
    %vm449 = vweird.f32 %v141
    %v450 = vadd.s32 %v446, 3
    %v451 = vand.u32 %v450, 3
    %vm452 = vcmp.lt.s32.totalorder %v451, 2
    %vm453 = vcmp.eq.s32.totalorder %v451, 0
    %v454 = vxor.u32 %v448, 2147483648
    %v455 = vsel %vm453, %v447, %v454
    %vm456 = vcmp.eq.s32.totalorder %v451, 2
    %v457 = vxor.u32 %v447, 2147483648
    %v458 = vsel %vm456, %v457, %v448
    %v459 = vsel %vm452, %v455, %v458
    %v460 = vsel %vm449, nan, %v459
    %v461 = vand.u32 2147483647, %v146
    %vm462 = vcmp.le.f32.partialorder %v461, 0.7853982
    %vm463 = vcmp.lt.s32.totalorder %v146, 0
    %v464 = vand.u32 %v146, 2139095040
    %v465 = vshrl.u32 %v464, 23
    %v466 = vsub.s32 %v465, 127
    %v467 = vand.u32 2147483647, %v146
    %v468 = vand.u32 %v467, 8388607
    %v469 = vor.u32 %v468, 8388608
    %v470 = vsub.s32 0, %v469
    %v471 = vadd.s32 %v466, 1
    %vm472 = vcmp.gt.s32.totalorder %v471, 0
    %v473 = vsel %vm472, %v471, 0
    %v474 = vshrl.u32 %v473, 5
    %v475 = vand.u32 %v473, 31
    %v476 = vsub.s32 32, %v475
    %v477 = vshrl.u32 683565275, %v476
    %v478 = vshll.u32 683565275, %v475
    %v479 = vshrl.u32 2475754826, %v476
    %v480 = vor.u32 %v478, %v479
    %v481 = vshll.u32 2475754826, %v475
    %v482 = vshrl.u32 2131351028, %v476
    %v483 = vor.u32 %v481, %v482
    %v484 = vshll.u32 2131351028, %v475
    %v485 = vshrl.u32 2102212464, %v476
    %v486 = vor.u32 %v484, %v485
    %v487 = vshll.u32 2102212464, %v475
    %v488 = vshrl.u32 920167782, %v476
    %v489 = vor.u32 %v487, %v488
    %v490 = vshll.u32 920167782, %v475
    %v491 = vshrl.u32 1326507024, %v476
    %v492 = vor.u32 %v490, %v491
    %vm493 = vcmp.lt.s32.totalorder %v474, 1
    %vm494 = vcmp.lt.s32.totalorder %v474, 2
    %vm495 = vcmp.lt.s32.totalorder %v474, 3
    %vm496 = vcmp.lt.s32.totalorder %v474, 4
    %v497 = vsel %vm493, %v477, %v480
    %v498 = vsel %vm496, %v486, 2102212464
    %v499 = vsel %vm495, %v483, %v498
    %v500 = vsel %vm494, %v497, %v499
    %v501 = vsel %vm493, %v480, %v483
    %v502 = vsel %vm496, %v489, 920167782
    %v503 = vsel %vm495, %v486, %v502
    %v504 = vsel %vm494, %v501, %v503
    %v505 = vsel %vm493, %v483, %v486
    %v506 = vsel %vm496, %v492, 1326507024
    %v507 = vsel %vm495, %v489, %v506
    %v508 = vsel %vm494, %v505, %v507
    %v509 = vshll.u32 %v469, 8
    %v510 = vmul.u32.u64.compose %v509, %v508
    %v511 = vextract.low.u32 %v510
    %v512 = vextract.high.u32 %v510
    %v513 = vmul.u32.u64.compose %v509, %v504
    %v514 = vextract.low.u32 %v513
    %v515 = vextract.high.u32 %v513
    %v516 = vmul.u32 %v509, %v500
    %v517 = vadd.s32 %v512, %v514
    %vm518 = vc.u32 %v512, %v514
    %v519 = vadd.s32 %v515, 1
    %v520 = vsel %vm518, %v519, %v515
    %v521 = vadd.s32 %v516, %v520
    %v522 = vadd.s32 %v521, 536870912
    %v523 = vshrl.u32 %v522, 30
    %v524 = vshll.u32 %v523, 30
    %v525 = vsub.s32 %v521, %v524
    %vm526 = vcmp.lt.s32.totalorder %v525, 0
    %v527 = vsub.s32 0, %v525
    %v528 = vsel %vm526, %v527, %v525
    %v529 = vclz %v528
    %v530 = vsub.s32 %v529, 2
    %vm531 = vcmp.gt.s32.totalorder 0, %v530
    %v532 = vsel %vm531, 0, %v530
    %v533 = vsub.s32 32, %v532
    %v534 = vshll.u32 %v525, %v532
    %v535 = vshrl.u32 %v517, %v533
    %v536 = vor.u32 %v534, %v535
    %v537 = vsub.s32 4294967266, %v532
    %v538 = vadd.s32 %v537, 127
    %v539 = vshll.u32 %v538, 23
    %v540 = vor.u32 4788187, %v539
    %v541 = vand.u32 2147483647, %v540
    %v543 = vcvt.s32.f32 %v536
    %v544 = vmul.f32 %v543, %v541
    %v545 = vxor.u32 %v544, 2147483648
    %v546 = vsel %vm463, %v545, %v544
    %v547 = vsub.s32 4, %v523
    %v548 = vsel %vm463, %v547, %v523
    %v549 = vsel %vm462, %v146, %v546
    %v550 = vsel %vm462, 0, %v548
    %v551 = vcosq.f32.pop %v549
    %v552 = vsinq.f32.pop %v549
    %vm553 = vweird.f32 %v146
    %v554 = vadd.s32 %v550, 3
    %v555 = vand.u32 %v554, 3
    %vm556 = vcmp.lt.s32.totalorder %v555, 2
    %vm557 = vcmp.eq.s32.totalorder %v555, 0
    %v558 = vxor.u32 %v552, 2147483648
    %v559 = vsel %vm557, %v551, %v558
    %vm560 = vcmp.eq.s32.totalorder %v555, 2
    %v561 = vxor.u32 %v551, 2147483648
    %v562 = vsel %vm560, %v561, %v552
    %v563 = vsel %vm556, %v559, %v562
    %v564 = vsel %vm553, nan, %v563
    %v565 = vld [vmem:[%s3] sm:$0x3]
    %vm566 = vcmask 261120
    %v568 = vsel %vm566, %v565, 0
    %570 = vmatprep.subr.mxu0 0.0
    %571 = vmatpush1.msra.mxu0 %v252
    %572 = vmatprep.subr.mxu0 0.0
    %573 = vmatpush1.msra.mxu0 %v356
    %574 = vmatprep.subr.mxu0 0.0
    %575 = vmatpush1.msra.mxu0 %v460
    %576 = vmatprep.subr.mxu0 0.0
    %577 = vmatpush1.msra.mxu0 %v564
    %578 = vmatprep.subr.mxu0 0.0
    %579 = vmatpush1.msra.mxu0 0.0
    %580 = vmatprep.subr.mxu0 0.0
    %581 = vmatpush1.msra.mxu0 0.0
    %582 = vmatprep.subr.mxu0 0.0
    %583 = vmatpush1.msra.mxu0 0.0
    %584 = vmatprep.subr.mxu0 0.0
    %585 = vmatpush1.msra.mxu0 0.0
    %586 = vmatprep.subr.mxu0 0.0
    %587 = vmatpush1.msra.mxu0 0.0
    %588 = vmatprep.subr.mxu0 0.0
    %589 = vmatpush1.msra.mxu0 0.0
    %590 = vmatprep.subr.mxu0 0.0
    %591 = vmatpush1.msra.mxu0 0.0
    %592 = vmatprep.subr.mxu0 0.0
    %593 = vmatpush1.msra.mxu0 0.0
    %594 = vmatprep.subr.mxu0 0.0
    %595 = vmatpush1.msra.mxu0 0.0
    %596 = vmatprep.subr.mxu0 0.0
    %597 = vmatpush1.msra.mxu0 0.0
    %598 = vmatprep.subr.mxu0 0.0
    %599 = vmatpush1.msra.mxu0 0.0
    %600 = vmatprep.subr.mxu0 0.0
    %601 = vmatpush1.msra.mxu0 0.0
    %602 = vmatprep.subr.mxu0 0.0
    %603 = vmatpush1.msra.mxu0 0.0
    %604 = vmatprep.subr.mxu0 0.0
    %605 = vmatpush1.msra.mxu0 0.0
    %606 = vmatprep.subr.mxu0 0.0
    %607 = vmatpush1.msra.mxu0 0.0
    %608 = vmatprep.subr.mxu0 0.0
    %609 = vmatpush1.msra.mxu0 0.0
    %610 = vmatprep.subr.mxu0 0.0
    %611 = vmatpush1.msra.mxu0 0.0
    %612 = vmatprep.subr.mxu0 0.0
    %613 = vmatpush1.msra.mxu0 0.0
    %614 = vmatprep.subr.mxu0 0.0
    %615 = vmatpush1.msra.mxu0 0.0
    %616 = vmatprep.subr.mxu0 0.0
    %617 = vmatpush1.msra.mxu0 0.0
    %618 = vmatprep.subr.mxu0 0.0
    %619 = vmatpush1.msra.mxu0 0.0
    %620 = vmatprep.subr.mxu0 0.0
    %621 = vmatpush1.msra.mxu0 0.0
    %622 = vmatprep.subr.mxu0 0.0
    %623 = vmatpush1.msra.mxu0 0.0
    %624 = vmatprep.subr.mxu0 0.0
    %625 = vmatpush1.msra.mxu0 0.0
    %626 = vmatprep.subr.mxu0 0.0
    %627 = vmatpush1.msra.mxu0 0.0
    %628 = vmatprep.subr.mxu0 0.0
    %629 = vmatpush1.msra.mxu0 0.0
    %630 = vmatprep.subr.mxu0 0.0
    %631 = vmatpush1.msra.mxu0 0.0
    %632 = vmatprep.subr.mxu0 0.0
    %633 = vmatpush1.msra.mxu0 0.0
    %634 = vmatprep.mubr.f32.mxu0 0.0
    %635 = vmatmul.mubr.f32.gmra.mrb[0].mxu0 %v568
    %v636 = vpop.f32.mrb[0].mxu0
    %v637 = vadd.f32 0.0, %v636
    %v638 = vpop.f32.mrb[0].mxu0
    %639 = vdwg.mxu0
    %vm640 = vcmask 123904
    %641 = vst.msk [vmem:[#allocation2] sm:$0x3] %vm640, %v637
    // Predicated region
    $region18: #{policy_forward_t.1} parent=1 // pred_check
      _
    $region19: #{policy_forward_t.1} parent=1 // pred_check_branch
      %643 = sbr.rel (0) target = $region21
    $region20: #{policy_forward_t.1} parent=1 // pred_region
      %s645 = ssub.s32 32, 32
      %646 = vsyncadd [#allocation3], %s645
      %s648 = sshll.u32 [#allocation2], 4
      %s649 = int_to_ptr.vmem [resolvable:$true] %s648
      %651 = dma.vmem_to_hbm [thread:$0]  %s649, 32, %s4, [#allocation3]
    $region21: #{policy_forward_t.1} parent=1 // pred_fallthru
      _
    // Predicated region
    $region22: #{policy_forward_t.1} parent=1 // pred_check
      _
    $region23: #{policy_forward_t.1} parent=1 // pred_check_branch
      %653 = sbr.rel (0) target = $region25
    $region24: #{policy_forward_t.1} parent=1 // pred_region
      %654 = dma.done [#allocation3], 32
    $region25: #{policy_forward_t.1} parent=1 // pred_fallthru
      _
    %655 = vsyncpa [#allocation3], 1

</llo_original>
